<compile_context>
chip_gen: v5e
topology: v5e:2x2
jax: 0.10.0
libtpu: 0.0.40
codegen_flags: <defaults>
</compile_context>

<pallas_src>
import jax
import jax.numpy as jnp
from jax.experimental import pallas as pl
from jax.experimental.pallas import tpu as pltpu

LANE = 128
SUBLANE = 8


def _round_up(x, m):
    return ((x + m - 1) // m) * m


def _cdiv(a, b):
    return -(-a // b)


def _tpu_config():
    """Generation-aware knobs: VMEM budget, MXU width, megacore split, row tile."""
    kind = ""
    try:
        kind = jax.devices()[0].device_kind.lower()
    except Exception:
        pass
    is_v7 = "7" in kind
    is_v5 = "v5" in kind
    vmem_cap = None
    try:
        vmem_cap = int(pltpu.get_tpu_info().vmem_capacity_bytes)
    except Exception:
        vmem_cap = None
    if vmem_cap is None or vmem_cap <= 0:
        vmem_cap = 64 * 1024 * 1024 if is_v7 else 128 * 1024 * 1024
    # Never request all physical VMEM; leave headroom for Mosaic internal scratch.
    vmem_budget = min(vmem_cap - 8 * 1024 * 1024, 100 * 1024 * 1024)
    return dict(
        vmem_budget=int(vmem_budget),
        mxu_256=not is_v5,                   # v6e / v7x have 2x256^2 MXUs
        min_grid_steps=2 if is_v7 else 1,    # shard row tiles across v7x's 2 TCs
        row_tile=256 if is_v7 else 512,      # bigger tiles on 128 MiB-VMEM parts
    )


def _feat_pad(d, mxu_256):
    # 256-align on the 256-wide MXUs when the real dim justifies the extra zero
    # padding; otherwise 128 (lane width / v5e MXU width).
    align = 256 if (mxu_256 and d >= 192) else LANE
    return _round_up(d, align)


def prepare_mlp_params(weights, biases, *, mxu_256=None):
    """Pad + cast the MLP params ONCE (hoisted out of the per-call forward).

    weights[i]: (in_features, out_features)  (transposed vs PyTorch nn.Linear.weight)
    biases[i]:  (out_features,)
    Zero-padded K rows / N cols / bias lanes contribute exactly 0 and stay 0 through
    ReLU, so results are unchanged.
    """
    if mxu_256 is None:
        mxu_256 = _tpu_config()["mxu_256"]
    dims = [int(weights[0].shape[0])] + [int(w.shape[1]) for w in weights]
    dims_pad = [_feat_pad(d, mxu_256) for d in dims]
    w_p, b_p = [], []
    for i, (w, b) in enumerate(zip(weights, biases)):
        kp, npad = dims_pad[i], dims_pad[i + 1]
        w_p.append(jnp.pad(w.astype(jnp.bfloat16),
                           ((0, kp - w.shape[0]), (0, npad - w.shape[1]))))
        b_p.append(jnp.pad(b.astype(jnp.float32),
                           (0, npad - b.shape[0])).reshape(1, npad))
    return dict(weights=w_p, biases=b_p, dims=dims, dims_pad=dims_pad)


def _mlp_kernel(*refs):
    """refs = (x_ref, w0, b0, w1, b1, ..., wL, bL, out_ref).

    x / weights are bf16 (MXU-native), biases f32. f32 accumulation; ReLU after
    every layer except the last (matches the nn.Sequential); Dropout = identity.
    """
    x_ref, out_ref = refs[0], refs[-1]
    wb = refs[1:-1]
    n_layers = len(wb) // 2

    h = x_ref[...]                               # bf16 (TM, K0_pad)
    for i in range(n_layers):
        w = wb[2 * i][...]                       # bf16 (K_pad, N_pad)
        b = wb[2 * i + 1][...]                   # f32  (1, N_pad)
        acc = jnp.dot(h, w, preferred_element_type=jnp.float32) + b
        if i < n_layers - 1:
            h = jnp.maximum(acc, 0.0).astype(jnp.bfloat16)
        else:
            out_ref[...] = acc.astype(out_ref.dtype)


def mlp_model_forward(x, params, output_dim, *, row_tile=None, out_dtype=jnp.float32):
    """Pallas MLPModel.forward:  x [B, T, N, C] -> [B, T, N, output_dim].

    `params` comes from prepare_mlp_params (padded bf16 weights, f32 biases).
    out_dtype=jnp.bfloat16 halves the kernel writeback (helps v5e's single store
    slot / low HBM BW) at a small precision cost; default f32 for parity.
    """
    cfg = _tpu_config()
    if row_tile is None:
        row_tile = cfg["row_tile"]

    weights, biases = params["weights"], params["biases"]
    dims, dims_pad = params["dims"], params["dims_pad"]
    n_layers = len(weights)

    B, T, N, C = x.shape
    out_feat = dims[-1]
    assert out_feat == T * output_dim, (out_feat, T, output_dim)
    assert dims[0] == T * C, (dims[0], T, C)

    rows = B * N
    k0_pad, out_pad = dims_pad[0], dims_pad[-1]
    out_itemsize = jnp.dtype(out_dtype).itemsize
    param_bytes = (sum(int(a.size) * a.dtype.itemsize for a in weights)
                   + sum(int(a.size) * a.dtype.itemsize for a in biases))

    # ---- VMEM model -> largest safe row tile ------------------------------------
    # params: 1x (single-buffered, grid-invariant); x/out tiles: 2x (pipeline);
    # live activations: bf16 h (TM x maxK) and f32 acc (TM x maxN) coexist.
    scratch_headroom = 2 * 1024 * 1024
    avail = cfg["vmem_budget"] - param_bytes - scratch_headroom
    if avail <= 0:
        raise ValueError(
            f"padded MLP params ({param_bytes} B) exceed the VMEM budget "
            f"({cfg['vmem_budget']} B); reduce hidden_dim or shard weights over K/N.")
    row_bytes = (2 * k0_pad * 2                      # x tile (bf16) double-buffered
                 + 2 * out_pad * out_itemsize        # out tile double-buffered
                 + max(dims_pad) * 2                 # live bf16 activation h
                 + max(dims_pad[1:]) * 4)            # live f32 accumulator
    tm_cap = max(SUBLANE, (avail // row_bytes) // SUBLANE * SUBLANE)

    # ---- adaptive row tiling: <= 7 pad rows; >= 2 grid steps on v7x --------------
    rows_aligned = _round_up(rows, SUBLANE)
    tm_upper = min(row_tile, tm_cap, rows_aligned)
    min_steps = cfg["min_grid_steps"] if rows_aligned >= 2 * SUBLANE else 1
    n_steps = max(_cdiv(rows_aligned, tm_upper), min_steps)
    TM = min(_round_up(_cdiv(rows_aligned, n_steps), SUBLANE), tm_upper)
    grid_steps = _cdiv(rows_aligned, TM)
    rows_pad = grid_steps * TM

    # ---- activation prep: single cast -> transpose -> pad pass -------------------
    # Cast to bf16 BEFORE the transpose (halves its HBM write traffic), then one
    # fused jnp.pad to the tile/lane-aligned slab the kernel streams.
    # TODO(synk): fold permute(0,2,1,3)+reshape into the kernel via a (B, N-tile)
    # grid with in_spec block (1, T, tn, C) + in-kernel pltpu.einshape relayout,
    # removing this wrapper HBM pass entirely.
    x_rows = jnp.transpose(x.astype(jnp.bfloat16), (0, 2, 1, 3)).reshape(rows, T * C)
    x_p = jnp.pad(x_rows, ((0, rows_pad - rows), (0, k0_pad - dims[0])))

    args = [x_p]
    for w, b in zip(weights, biases):
        args.append(w)
        args.append(b)

    out_spec = pl.BlockSpec((TM, out_pad), lambda i: (i, 0))
    flops = 2 * rows_pad * sum(dims_pad[i] * dims_pad[i + 1] for i in range(n_layers))
    bytes_accessed = int(x_p.size) * 2 + rows_pad * out_pad * out_itemsize + param_bytes
    vmem_need = param_bytes + TM * row_bytes + scratch_headroom
    vmem_limit = int(min(cfg["vmem_budget"],
                         max(vmem_need + 4 * 1024 * 1024, 16 * 1024 * 1024)))

    def _run(single_buffer_params):
        kw = dict(pipeline_mode=pl.Buffered(1)) if single_buffer_params else {}
        in_specs = [pl.BlockSpec((TM, k0_pad), lambda i: (i, 0))]
        for a in args[1:]:
            # Grid-invariant index_map -> VMEM-resident across all row tiles.
            in_specs.append(pl.BlockSpec(a.shape, lambda i: (0, 0), **kw))
        out = pl.pallas_call(
            _mlp_kernel,
            out_shape=jax.ShapeDtypeStruct((rows_pad, out_pad), out_dtype),
            grid=(grid_steps,),
            in_specs=in_specs,
            out_specs=out_spec,
            compiler_params=pltpu.CompilerParams(
                dimension_semantics=("parallel",),
                vmem_limit_bytes=vmem_limit,
            ),
            cost_estimate=pl.CostEstimate(
                flops=int(flops), transcendentals=0,
                bytes_accessed=int(bytes_accessed)),
        )(*args)
        return jax.block_until_ready(out)

    try:
        out_rows = _run(True)       # params single-buffered (1x VMEM footprint)
    except Exception:
        # Fallback for jax builds without BlockSpec(pipeline_mode=...): default
        # double-buffering (params cost 2x VMEM; results identical).
        out_rows = _run(False)

    # Drop padding, reshape(B, N, T, output_dim), permute(0,2,1,3) -> [B,T,N,out]
    out = out_rows[:rows, :out_feat].reshape(B, N, T, output_dim)
    return jnp.transpose(out, (0, 2, 1, 3)).astype(x.dtype)


def init_mlp_params(key, seq_len, input_dim, hidden_dim, num_layers, output_dim):
    """PyTorch-style U(-1/sqrt(fan_in), 1/sqrt(fan_in)) init; weights are (in, out)."""
    dims = [seq_len * input_dim] + [hidden_dim] * num_layers + [seq_len * output_dim]
    weights, biases = [], []
    for i in range(len(dims) - 1):
        fan_in, fan_out = dims[i], dims[i + 1]
        key, kw, kb = jax.random.split(key, 3)
        bound = 1.0 / (fan_in ** 0.5)
        weights.append(jax.random.uniform(kw, (fan_in, fan_out), jnp.float32, -bound, bound))
        biases.append(jax.random.uniform(kb, (fan_out,), jnp.float32, -bound, bound))
    return weights, biases


def _reference_forward(x, weights, biases, output_dim):
    """Pure-JAX reference with the same bf16-operand / f32-accumulate numerics."""
    B, T, N, C = x.shape
    h = jnp.transpose(x, (0, 2, 1, 3)).reshape(B * N, T * C).astype(jnp.bfloat16)
    n = len(weights)
    for i, (w, b) in enumerate(zip(weights, biases)):
        h = jnp.dot(h, w.astype(jnp.bfloat16),
                    preferred_element_type=jnp.float32) + b.astype(jnp.float32)
        if i < n - 1:
            h = jnp.maximum(h, 0.0).astype(jnp.bfloat16)
    out = h.reshape(B, N, T, output_dim)
    return jnp.transpose(out, (0, 2, 1, 3)).astype(x.dtype)


if __name__ == "__main__":
    # [B, T, N, C] = batch, seq_len, num_nodes, input_dim
    B, T, N, C = 2, 8, 16, 2
    hidden_dim, num_layers, output_dim = 32, 2, 2

    key = jax.random.PRNGKey(0)
    key, kx = jax.random.split(key)
    x = jax.random.normal(kx, (B, T, N, C), jnp.float32)
    weights, biases = init_mlp_params(key, T, C, hidden_dim, num_layers, output_dim)

    params = prepare_mlp_params(weights, biases)   # pad/cast ONCE, reuse per forward
    out = jax.block_until_ready(mlp_model_forward(x, params, output_dim))

    ref = _reference_forward(x, weights, biases, output_dim)
    assert out.shape == (B, T, N, output_dim), out.shape
    assert jnp.allclose(out, ref, atol=1e-3, rtol=1e-3), "mismatch vs reference"

    print("KERNEL_OK")
</pallas_src>

<mosaic_0001>
module attributes {stable_mosaic.version = 11 : i64} {
  func.func @_mlp_kernel(%arg0: i32, %arg1: memref<32x128xbf16, #tpu.memory_space<vmem>>, %arg2: memref<128x128xbf16, #tpu.memory_space<vmem>>, %arg3: memref<1x128xf32, #tpu.memory_space<vmem>>, %arg4: memref<128x128xbf16, #tpu.memory_space<vmem>>, %arg5: memref<1x128xf32, #tpu.memory_space<vmem>>, %arg6: memref<128x128xbf16, #tpu.memory_space<vmem>>, %arg7: memref<1x128xf32, #tpu.memory_space<vmem>>, %arg8: memref<32x128xf32, #tpu.memory_space<vmem>>) attributes {dimension_semantics = [#tpu.dimension_semantics<parallel>], iteration_bounds = array<i64: 1>, scalar_prefetch = 0 : i64, scratch_operands = 0 : i64, tpu.core_type = #tpu.core_type<tc>, window_params = [{transform_indices = @transform_0, window_bounds = array<i64: 32, 128>}, {pipeline_mode = #tpu.pipeline_mode<synchronous>, transform_indices = @transform_1, window_bounds = array<i64: 128, 128>}, {pipeline_mode = #tpu.pipeline_mode<synchronous>, transform_indices = @transform_2, window_bounds = array<i64: 1, 128>}, {pipeline_mode = #tpu.pipeline_mode<synchronous>, transform_indices = @transform_3, window_bounds = array<i64: 128, 128>}, {pipeline_mode = #tpu.pipeline_mode<synchronous>, transform_indices = @transform_4, window_bounds = array<i64: 1, 128>}, {pipeline_mode = #tpu.pipeline_mode<synchronous>, transform_indices = @transform_5, window_bounds = array<i64: 128, 128>}, {pipeline_mode = #tpu.pipeline_mode<synchronous>, transform_indices = @transform_6, window_bounds = array<i64: 1, 128>}, {transform_indices = @transform_7, window_bounds = array<i64: 32, 128>}]} {
    %c0 = arith.constant 0 : index
    %c0_0 = arith.constant 0 : index
    %0 = vector.load %arg1[%c0, %c0_0] : memref<32x128xbf16, #tpu.memory_space<vmem>>, vector<32x128xbf16>
    %c0_1 = arith.constant 0 : index
    %c0_2 = arith.constant 0 : index
    %1 = vector.load %arg2[%c0_1, %c0_2] : memref<128x128xbf16, #tpu.memory_space<vmem>>, vector<128x128xbf16>
    %c0_3 = arith.constant 0 : index
    %c0_4 = arith.constant 0 : index
    %2 = vector.load %arg3[%c0_3, %c0_4] : memref<1x128xf32, #tpu.memory_space<vmem>>, vector<1x128xf32>
    %cst = arith.constant dense<0.000000e+00> : vector<32x128xf32>
    %3 = tpu.matmul %0, %1, %cst {dimension_numbers = #tpu.dot_dimension_numbers<[1], [0], [0], [1], [0, 0, 1, 1], [], []>} : vector<32x128xbf16>, vector<128x128xbf16>, vector<32x128xf32> -> vector<32x128xf32>
    %4 = vector.broadcast %2 : vector<1x128xf32> to vector<32x128xf32>
    %5 = arith.addf %3, %4 : vector<32x128xf32>
    %cst_5 = arith.constant 0.000000e+00 : f32
    %6 = vector.broadcast %cst_5 : f32 to vector<32x128xf32>
    %7 = arith.maximumf %5, %6 : vector<32x128xf32>
    %8 = arith.truncf %7 : vector<32x128xf32> to vector<32x128xbf16>
    %c0_6 = arith.constant 0 : index
    %c0_7 = arith.constant 0 : index
    %9 = vector.load %arg4[%c0_6, %c0_7] : memref<128x128xbf16, #tpu.memory_space<vmem>>, vector<128x128xbf16>
    %c0_8 = arith.constant 0 : index
    %c0_9 = arith.constant 0 : index
    %10 = vector.load %arg5[%c0_8, %c0_9] : memref<1x128xf32, #tpu.memory_space<vmem>>, vector<1x128xf32>
    %cst_10 = arith.constant dense<0.000000e+00> : vector<32x128xf32>
    %11 = tpu.matmul %8, %9, %cst_10 {dimension_numbers = #tpu.dot_dimension_numbers<[1], [0], [0], [1], [0, 0, 1, 1], [], []>} : vector<32x128xbf16>, vector<128x128xbf16>, vector<32x128xf32> -> vector<32x128xf32>
    %12 = vector.broadcast %10 : vector<1x128xf32> to vector<32x128xf32>
    %13 = arith.addf %11, %12 : vector<32x128xf32>
    %cst_11 = arith.constant 0.000000e+00 : f32
    %14 = vector.broadcast %cst_11 : f32 to vector<32x128xf32>
    %15 = arith.maximumf %13, %14 : vector<32x128xf32>
    %16 = arith.truncf %15 : vector<32x128xf32> to vector<32x128xbf16>
    %c0_12 = arith.constant 0 : index
    %c0_13 = arith.constant 0 : index
    %17 = vector.load %arg6[%c0_12, %c0_13] : memref<128x128xbf16, #tpu.memory_space<vmem>>, vector<128x128xbf16>
    %c0_14 = arith.constant 0 : index
    %c0_15 = arith.constant 0 : index
    %18 = vector.load %arg7[%c0_14, %c0_15] : memref<1x128xf32, #tpu.memory_space<vmem>>, vector<1x128xf32>
    %cst_16 = arith.constant dense<0.000000e+00> : vector<32x128xf32>
    %19 = tpu.matmul %16, %17, %cst_16 {dimension_numbers = #tpu.dot_dimension_numbers<[1], [0], [0], [1], [0, 0, 1, 1], [], []>} : vector<32x128xbf16>, vector<128x128xbf16>, vector<32x128xf32> -> vector<32x128xf32>
    %20 = vector.broadcast %18 : vector<1x128xf32> to vector<32x128xf32>
    %21 = arith.addf %19, %20 : vector<32x128xf32>
    %c0_17 = arith.constant 0 : index
    %c0_18 = arith.constant 0 : index
    %22 = vector.load %arg8[%c0_17, %c0_18] : memref<32x128xf32, #tpu.memory_space<vmem>>, vector<32x128xf32>
    tpu.vector_store %arg8[%c0_17, %c0_18], %21 {strides = array<i32>} : memref<32x128xf32, #tpu.memory_space<vmem>>, vector<32x128xf32>,
    return
  }
  func.func @transform_0(%arg0: i32) -> (i32, i32) {
    %c0_i32 = arith.constant 0 : i32
    %c0_i32_0 = arith.constant 0 : i32
    return %arg0, %c0_i32 : i32, i32
  }
  func.func @transform_1(%arg0: i32) -> (i32, i32) {
    %c0_i32 = arith.constant 0 : i32
    %c0_i32_0 = arith.constant 0 : i32
    %c0_i32_1 = arith.constant 0 : i32
    return %c0_i32, %c0_i32_0 : i32, i32
  }
  func.func @transform_2(%arg0: i32) -> (i32, i32) {
    %c0_i32 = arith.constant 0 : i32
    %c0_i32_0 = arith.constant 0 : i32
    %c0_i32_1 = arith.constant 0 : i32
    return %c0_i32, %c0_i32_0 : i32, i32
  }
  func.func @transform_3(%arg0: i32) -> (i32, i32) {
    %c0_i32 = arith.constant 0 : i32
    %c0_i32_0 = arith.constant 0 : i32
    %c0_i32_1 = arith.constant 0 : i32
    return %c0_i32, %c0_i32_0 : i32, i32
  }
  func.func @transform_4(%arg0: i32) -> (i32, i32) {
    %c0_i32 = arith.constant 0 : i32
    %c0_i32_0 = arith.constant 0 : i32
    %c0_i32_1 = arith.constant 0 : i32
    return %c0_i32, %c0_i32_0 : i32, i32
  }
  func.func @transform_5(%arg0: i32) -> (i32, i32) {
    %c0_i32 = arith.constant 0 : i32
    %c0_i32_0 = arith.constant 0 : i32
    %c0_i32_1 = arith.constant 0 : i32
    return %c0_i32, %c0_i32_0 : i32, i32
  }
  func.func @transform_6(%arg0: i32) -> (i32, i32) {
    %c0_i32 = arith.constant 0 : i32
    %c0_i32_0 = arith.constant 0 : i32
    %c0_i32_1 = arith.constant 0 : i32
    return %c0_i32, %c0_i32_0 : i32, i32
  }
  func.func @transform_7(%arg0: i32) -> (i32, i32) {
    %c0_i32 = arith.constant 0 : i32
    %c0_i32_0 = arith.constant 0 : i32
    return %arg0, %c0_i32 : i32, i32
  }
}

module attributes {stable_mosaic.version = 11 : i64} {
  func.func @_mlp_kernel(%arg0: i32, %arg1: memref<32x128xbf16, #tpu.memory_space<vmem>>, %arg2: memref<128x128xbf16, #tpu.memory_space<vmem>>, %arg3: memref<1x128xf32, #tpu.memory_space<vmem>>, %arg4: memref<128x128xbf16, #tpu.memory_space<vmem>>, %arg5: memref<1x128xf32, #tpu.memory_space<vmem>>, %arg6: memref<128x128xbf16, #tpu.memory_space<vmem>>, %arg7: memref<1x128xf32, #tpu.memory_space<vmem>>, %arg8: memref<32x128xf32, #tpu.memory_space<vmem>>) attributes {dimension_semantics = [#tpu.dimension_semantics<parallel>], iteration_bounds = array<i64: 1>, scalar_prefetch = 0 : i64, scratch_operands = 0 : i64, tpu.core_type = #tpu.core_type<tc>, window_params = [{transform_indices = @transform_0, window_bounds = array<i64: 32, 128>}, {pipeline_mode = #tpu.pipeline_mode<synchronous>, transform_indices = @transform_1, window_bounds = array<i64: 128, 128>}, {pipeline_mode = #tpu.pipeline_mode<synchronous>, transform_indices = @transform_2, window_bounds = array<i64: 1, 128>}, {pipeline_mode = #tpu.pipeline_mode<synchronous>, transform_indices = @transform_3, window_bounds = array<i64: 128, 128>}, {pipeline_mode = #tpu.pipeline_mode<synchronous>, transform_indices = @transform_4, window_bounds = array<i64: 1, 128>}, {pipeline_mode = #tpu.pipeline_mode<synchronous>, transform_indices = @transform_5, window_bounds = array<i64: 128, 128>}, {pipeline_mode = #tpu.pipeline_mode<synchronous>, transform_indices = @transform_6, window_bounds = array<i64: 1, 128>}, {transform_indices = @transform_7, window_bounds = array<i64: 32, 128>}]} {
    %c0 = arith.constant 0 : index
    %c0_0 = arith.constant 0 : index
    %0 = vector.load %arg1[%c0, %c0_0] : memref<32x128xbf16, #tpu.memory_space<vmem>>, vector<32x128xbf16>
    %c0_1 = arith.constant 0 : index
    %c0_2 = arith.constant 0 : index
    %1 = vector.load %arg2[%c0_1, %c0_2] : memref<128x128xbf16, #tpu.memory_space<vmem>>, vector<128x128xbf16>
    %c0_3 = arith.constant 0 : index
    %c0_4 = arith.constant 0 : index
    %2 = vector.load %arg3[%c0_3, %c0_4] : memref<1x128xf32, #tpu.memory_space<vmem>>, vector<1x128xf32>
    %cst = arith.constant dense<0.000000e+00> : vector<32x128xf32>
    %3 = tpu.matmul %0, %1, %cst {dimension_numbers = #tpu.dot_dimension_numbers<[1], [0], [0], [1], [0, 0, 1, 1], [], []>} : vector<32x128xbf16>, vector<128x128xbf16>, vector<32x128xf32> -> vector<32x128xf32>
    %4 = vector.broadcast %2 : vector<1x128xf32> to vector<32x128xf32>
    %5 = arith.addf %3, %4 : vector<32x128xf32>
    %cst_5 = arith.constant 0.000000e+00 : f32
    %6 = vector.broadcast %cst_5 : f32 to vector<32x128xf32>
    %7 = arith.maximumf %5, %6 : vector<32x128xf32>
    %8 = arith.truncf %7 : vector<32x128xf32> to vector<32x128xbf16>
    %c0_6 = arith.constant 0 : index
    %c0_7 = arith.constant 0 : index
    %9 = vector.load %arg4[%c0_6, %c0_7] : memref<128x128xbf16, #tpu.memory_space<vmem>>, vector<128x128xbf16>
    %c0_8 = arith.constant 0 : index
    %c0_9 = arith.constant 0 : index
    %10 = vector.load %arg5[%c0_8, %c0_9] : memref<1x128xf32, #tpu.memory_space<vmem>>, vector<1x128xf32>
    %cst_10 = arith.constant dense<0.000000e+00> : vector<32x128xf32>
    %11 = tpu.matmul %8, %9, %cst_10 {dimension_numbers = #tpu.dot_dimension_numbers<[1], [0], [0], [1], [0, 0, 1, 1], [], []>} : vector<32x128xbf16>, vector<128x128xbf16>, vector<32x128xf32> -> vector<32x128xf32>
    %12 = vector.broadcast %10 : vector<1x128xf32> to vector<32x128xf32>
    %13 = arith.addf %11, %12 : vector<32x128xf32>
    %cst_11 = arith.constant 0.000000e+00 : f32
    %14 = vector.broadcast %cst_11 : f32 to vector<32x128xf32>
    %15 = arith.maximumf %13, %14 : vector<32x128xf32>
    %16 = arith.truncf %15 : vector<32x128xf32> to vector<32x128xbf16>
    %c0_12 = arith.constant 0 : index
    %c0_13 = arith.constant 0 : index
    %17 = vector.load %arg6[%c0_12, %c0_13] : memref<128x128xbf16, #tpu.memory_space<vmem>>, vector<128x128xbf16>
    %c0_14 = arith.constant 0 : index
    %c0_15 = arith.constant 0 : index
    %18 = vector.load %arg7[%c0_14, %c0_15] : memref<1x128xf32, #tpu.memory_space<vmem>>, vector<1x128xf32>
    %cst_16 = arith.constant dense<0.000000e+00> : vector<32x128xf32>
    %19 = tpu.matmul %16, %17, %cst_16 {dimension_numbers = #tpu.dot_dimension_numbers<[1], [0], [0], [1], [0, 0, 1, 1], [], []>} : vector<32x128xbf16>, vector<128x128xbf16>, vector<32x128xf32> -> vector<32x128xf32>
    %20 = vector.broadcast %18 : vector<1x128xf32> to vector<32x128xf32>
    %21 = arith.addf %19, %20 : vector<32x128xf32>
    %c0_17 = arith.constant 0 : index
    %c0_18 = arith.constant 0 : index
    %22 = vector.load %arg8[%c0_17, %c0_18] : memref<32x128xf32, #tpu.memory_space<vmem>>, vector<32x128xf32>
    tpu.vector_store %arg8[%c0_17, %c0_18], %21 {strides = array<i32>} : memref<32x128xf32, #tpu.memory_space<vmem>>, vector<32x128xf32>,
    return
  }
  func.func @transform_0(%arg0: i32) -> (i32, i32) {
    %c0_i32 = arith.constant 0 : i32
    %c0_i32_0 = arith.constant 0 : i32
    return %arg0, %c0_i32 : i32, i32
  }
  func.func @transform_1(%arg0: i32) -> (i32, i32) {
    %c0_i32 = arith.constant 0 : i32
    %c0_i32_0 = arith.constant 0 : i32
    %c0_i32_1 = arith.constant 0 : i32
    return %c0_i32, %c0_i32_0 : i32, i32
  }
  func.func @transform_2(%arg0: i32) -> (i32, i32) {
    %c0_i32 = arith.constant 0 : i32
    %c0_i32_0 = arith.constant 0 : i32
    %c0_i32_1 = arith.constant 0 : i32
    return %c0_i32, %c0_i32_0 : i32, i32
  }
  func.func @transform_3(%arg0: i32) -> (i32, i32) {
    %c0_i32 = arith.constant 0 : i32
    %c0_i32_0 = arith.constant 0 : i32
    %c0_i32_1 = arith.constant 0 : i32
    return %c0_i32, %c0_i32_0 : i32, i32
  }
  func.func @transform_4(%arg0: i32) -> (i32, i32) {
    %c0_i32 = arith.constant 0 : i32
    %c0_i32_0 = arith.constant 0 : i32
    %c0_i32_1 = arith.constant 0 : i32
    return %c0_i32, %c0_i32_0 : i32, i32
  }
  func.func @transform_5(%arg0: i32) -> (i32, i32) {
    %c0_i32 = arith.constant 0 : i32
    %c0_i32_0 = arith.constant 0 : i32
    %c0_i32_1 = arith.constant 0 : i32
    return %c0_i32, %c0_i32_0 : i32, i32
  }
  func.func @transform_6(%arg0: i32) -> (i32, i32) {
    %c0_i32 = arith.constant 0 : i32
    %c0_i32_0 = arith.constant 0 : i32
    %c0_i32_1 = arith.constant 0 : i32
    return %c0_i32, %c0_i32_0 : i32, i32
  }
  func.func @transform_7(%arg0: i32) -> (i32, i32) {
    %c0_i32 = arith.constant 0 : i32
    %c0_i32_0 = arith.constant 0 : i32
    return %arg0, %c0_i32 : i32, i32
  }
}

</mosaic_0001>

<llo_original>
// kernel: tpu_custom_call.1
$region0: #{tpu_custom_call.1}
  #allocation0 [shape = 'u32[]', space=smem, size = 0x4, offset = 0x4, fixed_abs, tag = 'smem constant byte address 0x4 - core index']
  #allocation1 [shape = 'u32[72,128]{1,0:T(1,128)}', space=vmem, size = 0x9000, scoped, tag = 'internal scratch']
  %s0 = inlined_call_operand.hbm [shape: bf16[32,128], index: 0, kind: input, shape index: {}]
  %s1 = inlined_call_operand.hbm [shape: bf16[128,128], index: 1, kind: input, shape index: {}]
  %s2 = inlined_call_operand.vmem [shape: f32[1,128], index: 2, kind: input, shape index: {}]
  %s3 = inlined_call_operand.hbm [shape: bf16[128,128], index: 3, kind: input, shape index: {}]
  %s4 = inlined_call_operand.vmem [shape: f32[1,128], index: 4, kind: input, shape index: {}]
  %s5 = inlined_call_operand.hbm [shape: bf16[128,128], index: 5, kind: input, shape index: {}]
  %s6 = inlined_call_operand.vmem [shape: f32[1,128], index: 6, kind: input, shape index: {}]
  %s7 = inlined_call_operand.hbm [shape: f32[32,128], index: 7, kind: output, shape index: {}]
  %s8 = sld [smem:[#allocation0]]
  $region54: #{tpu_custom_call.1} parent=0
    _
  %s10 = ssub.s32 1, %s8
  %s11 = scalar_select 0, %s10, %s8
  $region1: #{tpu_custom_call.1} parent=0
    #allocation2 [shape = 'u8[8192]{0}', space=vmem, size = 0x2000, scoped, tag = 'input window, operand 0, single buffered']
    #allocation3 [shape = 's32[1]{0}', space=sflag, size = 0x4, scoped, tag = 'scoped memory for tpu_custom_call.1']
    #allocation4 [shape = 's32[1]{0}', space=sflag, size = 0x4, scoped, tag = 'scoped memory for tpu_custom_call.1']
    #allocation5 [shape = 'u8[32768]{0}', space=vmem, size = 0x8000, scoped, tag = 'input window, operand 1, single buffered']
    #allocation6 [shape = 's32[1]{0}', space=sflag, size = 0x4, scoped, tag = 'scoped memory for tpu_custom_call.1']
    #allocation7 [shape = 'u8[32768]{0}', space=vmem, size = 0x8000, scoped, tag = 'input window, operand 3, single buffered']
    #allocation8 [shape = 'u8[32768]{0}', space=vmem, size = 0x8000, scoped, tag = 'input window, operand 5, single buffered']
    #allocation9 [shape = 's32[1]{0}', space=sflag, size = 0x4, scoped, tag = 'scoped memory for tpu_custom_call.1']
    #allocation10 [shape = 'u8[16384]{0}', space=vmem, size = 0x4000, scoped, tag = 'output window, operand 0, single buffered']
    %12 = vsyncpa [#allocation3], 0
    %13 = vsyncpa [#allocation6], 0
    %14 = vsyncpa [#allocation9], 0
    %15 = vsyncpa [#allocation4], 0
    // Predicated region
    $region2: #{tpu_custom_call.1} parent=1 // pred_check
      _
    $region3: #{tpu_custom_call.1} parent=1 // pred_check_branch
      %17 = sbr.rel (0) target = $region5
    $region4: #{tpu_custom_call.1} parent=1 // pred_region
      %19 = vsyncadd [#allocation3], 0
      %s20 = sshll.u32 %s0, 4
      %s21 = int_to_ptr.hbm [resolvable:$true] %s20
      %s22 = sshll.u32 [#allocation2], 4
      %s23 = int_to_ptr.vmem [resolvable:$true] %s22
      %28 = dma.hbm_to_vmem [thread:$0]  %s21, 256, %s23, [#allocation3], 64, 64, 4
    $region5: #{tpu_custom_call.1} parent=1 // pred_fallthru
      _
    // Predicated region
    $region6: #{tpu_custom_call.1} parent=1 // pred_check
      _
    $region7: #{tpu_custom_call.1} parent=1 // pred_check_branch
      %30 = sbr.rel (0) target = $region9
    $region8: #{tpu_custom_call.1} parent=1 // pred_region
      %32 = vsyncadd [#allocation6], 0
      %s33 = sshll.u32 %s1, 4
      %s34 = int_to_ptr.hbm [resolvable:$true] %s33
      %s35 = sshll.u32 [#allocation5], 4
      %s36 = int_to_ptr.vmem [resolvable:$true] %s35
      %41 = dma.hbm_to_vmem [thread:$0]  %s34, 1024, %s36, [#allocation6], 64, 64, 4
    $region9: #{tpu_custom_call.1} parent=1 // pred_fallthru
      _
    // Predicated region
    $region10: #{tpu_custom_call.1} parent=1 // pred_check
      _
    $region11: #{tpu_custom_call.1} parent=1 // pred_check_branch
      %43 = sbr.rel (0) target = $region13
    $region12: #{tpu_custom_call.1} parent=1 // pred_region
      _
    $region13: #{tpu_custom_call.1} parent=1 // pred_fallthru
      _
    // Predicated region
    $region14: #{tpu_custom_call.1} parent=1 // pred_check
      _
    $region15: #{tpu_custom_call.1} parent=1 // pred_check_branch
      %45 = sbr.rel (0) target = $region17
    $region16: #{tpu_custom_call.1} parent=1 // pred_region
      %47 = vsyncadd [#allocation6], 0
      %s48 = sshll.u32 %s3, 4
      %s49 = int_to_ptr.hbm [resolvable:$true] %s48
      %s50 = sshll.u32 [#allocation7], 4
      %s51 = int_to_ptr.vmem [resolvable:$true] %s50
      %56 = dma.hbm_to_vmem [thread:$0]  %s49, 1024, %s51, [#allocation6], 64, 64, 4
    $region17: #{tpu_custom_call.1} parent=1 // pred_fallthru
      _
    // Predicated region
    $region18: #{tpu_custom_call.1} parent=1 // pred_check
      _
    $region19: #{tpu_custom_call.1} parent=1 // pred_check_branch
      %58 = sbr.rel (0) target = $region21
    $region20: #{tpu_custom_call.1} parent=1 // pred_region
      _
    $region21: #{tpu_custom_call.1} parent=1 // pred_fallthru
      _
    // Predicated region
    $region22: #{tpu_custom_call.1} parent=1 // pred_check
      _
    $region23: #{tpu_custom_call.1} parent=1 // pred_check_branch
      %60 = sbr.rel (0) target = $region25
    $region24: #{tpu_custom_call.1} parent=1 // pred_region
      %62 = vsyncadd [#allocation9], 0
      %s63 = sshll.u32 %s5, 4
      %s64 = int_to_ptr.hbm [resolvable:$true] %s63
      %s65 = sshll.u32 [#allocation8], 4
      %s66 = int_to_ptr.vmem [resolvable:$true] %s65
      %71 = dma.hbm_to_vmem [thread:$0]  %s64, 1024, %s66, [#allocation9], 64, 64, 4
    $region25: #{tpu_custom_call.1} parent=1 // pred_fallthru
      _
    // Predicated region
    $region26: #{tpu_custom_call.1} parent=1 // pred_check
      _
    $region27: #{tpu_custom_call.1} parent=1 // pred_check_branch
      %73 = sbr.rel (0) target = $region29
    $region28: #{tpu_custom_call.1} parent=1 // pred_region
      _
    $region29: #{tpu_custom_call.1} parent=1 // pred_fallthru
      _
    // Predicated region
    $region30: #{tpu_custom_call.1} parent=1 // pred_check
      _
    $region31: #{tpu_custom_call.1} parent=1 // pred_check_branch
      %75 = sbr.rel (0) target = $region33
    $region32: #{tpu_custom_call.1} parent=1 // pred_region
      %77 = dma.done [#allocation3], 256
    $region33: #{tpu_custom_call.1} parent=1 // pred_fallthru
      _
    // Predicated region
    $region34: #{tpu_custom_call.1} parent=1 // pred_check
      _
    $region35: #{tpu_custom_call.1} parent=1 // pred_check_branch
      %79 = sbr.rel (0) target = $region37
    $region36: #{tpu_custom_call.1} parent=1 // pred_region
      %81 = dma.done [#allocation6], 1024
    $region37: #{tpu_custom_call.1} parent=1 // pred_fallthru
      _
    // Predicated region
    $region38: #{tpu_custom_call.1} parent=1 // pred_check
      _
    $region39: #{tpu_custom_call.1} parent=1 // pred_check_branch
      %83 = sbr.rel (0) target = $region41
    $region40: #{tpu_custom_call.1} parent=1 // pred_region
      %85 = dma.done [#allocation6], 1024
    $region41: #{tpu_custom_call.1} parent=1 // pred_fallthru
      _
    // Predicated region
    $region42: #{tpu_custom_call.1} parent=1 // pred_check
      _
    $region43: #{tpu_custom_call.1} parent=1 // pred_check_branch
      %87 = sbr.rel (0) target = $region45
    $region44: #{tpu_custom_call.1} parent=1 // pred_region
      %89 = dma.done [#allocation9], 1024
    $region45: #{tpu_custom_call.1} parent=1 // pred_fallthru
      _
    %v90 = vld [vmem:[#allocation2] sm:$0xf]
    %v91 = vld [vmem:[#allocation2 + $0x4] sm:$0xf]
    %v92 = vld [vmem:[#allocation2 + $0x8] sm:$0xf]
    %v93 = vld [vmem:[#allocation2 + $0xc] sm:$0xf]
    %v94 = vld [vmem:[#allocation5] sm:$0xf]
    %v95 = vld [vmem:[#allocation5 + $0x4] sm:$0xf]
    %v96 = vld [vmem:[#allocation5 + $0x8] sm:$0xf]
    %v97 = vld [vmem:[#allocation5 + $0xc] sm:$0xf]
    %v98 = vld [vmem:[#allocation5 + $0x10] sm:$0xf]
    %v99 = vld [vmem:[#allocation5 + $0x14] sm:$0xf]
    %v100 = vld [vmem:[#allocation5 + $0x18] sm:$0xf]
    %v101 = vld [vmem:[#allocation5 + $0x1c] sm:$0xf]
    %v102 = vld [vmem:[#allocation5 + $0x20] sm:$0xf]
    %v103 = vld [vmem:[#allocation5 + $0x24] sm:$0xf]
    %v104 = vld [vmem:[#allocation5 + $0x28] sm:$0xf]
    %v105 = vld [vmem:[#allocation5 + $0x2c] sm:$0xf]
    %v106 = vld [vmem:[#allocation5 + $0x30] sm:$0xf]
    %v107 = vld [vmem:[#allocation5 + $0x34] sm:$0xf]
    %v108 = vld [vmem:[#allocation5 + $0x38] sm:$0xf]
    %v109 = vld [vmem:[#allocation5 + $0x3c] sm:$0xf]
    %v110 = vld [vmem:[%s2] sm:$0x1]
    %v112 = vperm.slane %v110, 0
    %v118 = vunpack.c.l.b16 %v90
    %v119 = vunpack.c.l.b16 %v91
    %v120 = vunpack.c.l.b16 %v92
    %v121 = vunpack.c.l.b16 %v93
    %v122 = vpack.c.b16 %v119, %v118
    %v123 = vpack.c.b16 %v121, %v120
    %v142 = vunpack.c.l.b16 %v94
    %v143 = vunpack.c.l.b16 %v95
    %v144 = vunpack.c.l.b16 %v96
    %v145 = vunpack.c.l.b16 %v97
    %v146 = vunpack.c.l.b16 %v98
    %v147 = vunpack.c.l.b16 %v99
    %v148 = vunpack.c.l.b16 %v100
    %v149 = vunpack.c.l.b16 %v101
    %v150 = vunpack.c.l.b16 %v102
    %v151 = vunpack.c.l.b16 %v103
    %v152 = vunpack.c.l.b16 %v104
    %v153 = vunpack.c.l.b16 %v105
    %v154 = vunpack.c.l.b16 %v106
    %v155 = vunpack.c.l.b16 %v107
    %v156 = vunpack.c.l.b16 %v108
    %v157 = vunpack.c.l.b16 %v109
    %v158 = vpack.c.b16 %v143, %v142
    %v159 = vpack.c.b16 %v145, %v144
    %v160 = vpack.c.b16 %v147, %v146
    %v161 = vpack.c.b16 %v149, %v148
    %v162 = vpack.c.b16 %v151, %v150
    %v163 = vpack.c.b16 %v153, %v152
    %v164 = vpack.c.b16 %v155, %v154
    %v165 = vpack.c.b16 %v157, %v156
    %174 = vmatpush.bf16.msra.mxu0 %v165
    %175 = vmatpush.bf16.msra.mxu0 %v164
    %176 = vmatpush.bf16.msra.mxu0 %v163
    %177 = vmatpush.bf16.msra.mxu0 %v162
    %178 = vmatpush.bf16.msra.mxu0 %v161
    %179 = vmatpush.bf16.msra.mxu0 %v160
    %180 = vmatpush.bf16.msra.mxu0 %v159
    %181 = vmatpush.bf16.msra.mxu0 %v158
    %182 = vmatmul.bf16.gmra.mxu0 %v122
    %v183 = vpop.f32.mrf.mxu0
    %v184 = vadd.f32 %v112, %v183
    %v185 = vpop.f32.mrf.mxu0
    %v186 = vadd.f32 %v112, %v185
    %187 = vmatmul.bf16.gmra.mxu0 %v123
    %v188 = vpop.f32.mrf.mxu0
    %v189 = vadd.f32 %v112, %v188
    %v190 = vpop.f32.mrf.mxu0
    %v191 = vadd.f32 %v112, %v190
    %192 = vdwg.mxu0
    %v193 = vmax.f32 %v184, 0.0
    %v194 = vmax.f32 %v186, 0.0
    %v195 = vmax.f32 %v189, 0.0
    %v196 = vmax.f32 %v191, 0.0
    %v197 = vpack.c.bf16 %v194, %v193
    %v198 = vpack.c.bf16 %v196, %v195
    %v199 = vld [vmem:[#allocation7] sm:$0xf]
    %v200 = vld [vmem:[#allocation7 + $0x4] sm:$0xf]
    %v201 = vld [vmem:[#allocation7 + $0x8] sm:$0xf]
    %v202 = vld [vmem:[#allocation7 + $0xc] sm:$0xf]
    %v203 = vld [vmem:[#allocation7 + $0x10] sm:$0xf]
    %v204 = vld [vmem:[#allocation7 + $0x14] sm:$0xf]
    %v205 = vld [vmem:[#allocation7 + $0x18] sm:$0xf]
    %v206 = vld [vmem:[#allocation7 + $0x1c] sm:$0xf]
    %v207 = vld [vmem:[#allocation7 + $0x20] sm:$0xf]
    %v208 = vld [vmem:[#allocation7 + $0x24] sm:$0xf]
    %v209 = vld [vmem:[#allocation7 + $0x28] sm:$0xf]
    %v210 = vld [vmem:[#allocation7 + $0x2c] sm:$0xf]
    %v211 = vld [vmem:[#allocation7 + $0x30] sm:$0xf]
    %v212 = vld [vmem:[#allocation7 + $0x34] sm:$0xf]
    %v213 = vld [vmem:[#allocation7 + $0x38] sm:$0xf]
    %v214 = vld [vmem:[#allocation7 + $0x3c] sm:$0xf]
    %v215 = vld [vmem:[%s4] sm:$0x1]
    %v217 = vperm.slane %v215, 0
    %v235 = vunpack.c.l.b16 %v199
    %v236 = vunpack.c.l.b16 %v200
    %v237 = vunpack.c.l.b16 %v201
    %v238 = vunpack.c.l.b16 %v202
    %v239 = vunpack.c.l.b16 %v203
    %v240 = vunpack.c.l.b16 %v204
    %v241 = vunpack.c.l.b16 %v205
    %v242 = vunpack.c.l.b16 %v206
    %v243 = vunpack.c.l.b16 %v207
    %v244 = vunpack.c.l.b16 %v208
    %v245 = vunpack.c.l.b16 %v209
    %v246 = vunpack.c.l.b16 %v210
    %v247 = vunpack.c.l.b16 %v211
    %v248 = vunpack.c.l.b16 %v212
    %v249 = vunpack.c.l.b16 %v213
    %v250 = vunpack.c.l.b16 %v214
    %v251 = vpack.c.b16 %v236, %v235
    %v252 = vpack.c.b16 %v238, %v237
    %v253 = vpack.c.b16 %v240, %v239
    %v254 = vpack.c.b16 %v242, %v241
    %v255 = vpack.c.b16 %v244, %v243
    %v256 = vpack.c.b16 %v246, %v245
    %v257 = vpack.c.b16 %v248, %v247
    %v258 = vpack.c.b16 %v250, %v249
    %267 = vmatpush.bf16.msra.mxu0 %v258
    %268 = vmatpush.bf16.msra.mxu0 %v257
    %269 = vmatpush.bf16.msra.mxu0 %v256
    %270 = vmatpush.bf16.msra.mxu0 %v255
    %271 = vmatpush.bf16.msra.mxu0 %v254
    %272 = vmatpush.bf16.msra.mxu0 %v253
    %273 = vmatpush.bf16.msra.mxu0 %v252
    %274 = vmatpush.bf16.msra.mxu0 %v251
    %275 = vmatmul.bf16.gmra.mxu0 %v197
    %v276 = vpop.f32.mrf.mxu0
    %v277 = vadd.f32 %v217, %v276
    %v278 = vpop.f32.mrf.mxu0
    %v279 = vadd.f32 %v217, %v278
    %280 = vmatmul.bf16.gmra.mxu0 %v198
    %v281 = vpop.f32.mrf.mxu0
    %v282 = vadd.f32 %v217, %v281
    %v283 = vpop.f32.mrf.mxu0
    %v284 = vadd.f32 %v217, %v283
    %285 = vdwg.mxu0
    %v286 = vmax.f32 %v277, 0.0
    %v287 = vmax.f32 %v279, 0.0
    %v288 = vmax.f32 %v282, 0.0
    %v289 = vmax.f32 %v284, 0.0
    %v290 = vpack.c.bf16 %v287, %v286
    %v291 = vpack.c.bf16 %v289, %v288
    %v292 = vld [vmem:[#allocation8] sm:$0xf]
    %v293 = vld [vmem:[#allocation8 + $0x4] sm:$0xf]
    %v294 = vld [vmem:[#allocation8 + $0x8] sm:$0xf]
    %v295 = vld [vmem:[#allocation8 + $0xc] sm:$0xf]
    %v296 = vld [vmem:[#allocation8 + $0x10] sm:$0xf]
    %v297 = vld [vmem:[#allocation8 + $0x14] sm:$0xf]
    %v298 = vld [vmem:[#allocation8 + $0x18] sm:$0xf]
    %v299 = vld [vmem:[#allocation8 + $0x1c] sm:$0xf]
    %v300 = vld [vmem:[#allocation8 + $0x20] sm:$0xf]
    %v301 = vld [vmem:[#allocation8 + $0x24] sm:$0xf]
    %v302 = vld [vmem:[#allocation8 + $0x28] sm:$0xf]
    %v303 = vld [vmem:[#allocation8 + $0x2c] sm:$0xf]
    %v304 = vld [vmem:[#allocation8 + $0x30] sm:$0xf]
    %v305 = vld [vmem:[#allocation8 + $0x34] sm:$0xf]
    %v306 = vld [vmem:[#allocation8 + $0x38] sm:$0xf]
    %v307 = vld [vmem:[#allocation8 + $0x3c] sm:$0xf]
    %v308 = vld [vmem:[%s6] sm:$0x1]
    %v310 = vperm.slane %v308, 0
    %v328 = vunpack.c.l.b16 %v292
    %v329 = vunpack.c.l.b16 %v293
    %v330 = vunpack.c.l.b16 %v294
    %v331 = vunpack.c.l.b16 %v295
    %v332 = vunpack.c.l.b16 %v296
    %v333 = vunpack.c.l.b16 %v297
    %v334 = vunpack.c.l.b16 %v298
    %v335 = vunpack.c.l.b16 %v299
    %v336 = vunpack.c.l.b16 %v300
    %v337 = vunpack.c.l.b16 %v301
    %v338 = vunpack.c.l.b16 %v302
    %v339 = vunpack.c.l.b16 %v303
    %v340 = vunpack.c.l.b16 %v304
    %v341 = vunpack.c.l.b16 %v305
    %v342 = vunpack.c.l.b16 %v306
    %v343 = vunpack.c.l.b16 %v307
    %v344 = vpack.c.b16 %v329, %v328
    %v345 = vpack.c.b16 %v331, %v330
    %v346 = vpack.c.b16 %v333, %v332
    %v347 = vpack.c.b16 %v335, %v334
    %v348 = vpack.c.b16 %v337, %v336
    %v349 = vpack.c.b16 %v339, %v338
    %v350 = vpack.c.b16 %v341, %v340
    %v351 = vpack.c.b16 %v343, %v342
    %360 = vmatpush.bf16.msra.mxu0 %v351
    %361 = vmatpush.bf16.msra.mxu0 %v350
    %362 = vmatpush.bf16.msra.mxu0 %v349
    %363 = vmatpush.bf16.msra.mxu0 %v348
    %364 = vmatpush.bf16.msra.mxu0 %v347
    %365 = vmatpush.bf16.msra.mxu0 %v346
    %366 = vmatpush.bf16.msra.mxu0 %v345
    %367 = vmatpush.bf16.msra.mxu0 %v344
    %368 = vmatmul.bf16.gmra.mxu0 %v290
    %v369 = vpop.f32.mrf.mxu0
    %v370 = vadd.f32 %v310, %v369
    %v371 = vpop.f32.mrf.mxu0
    %v372 = vadd.f32 %v310, %v371
    %373 = vmatmul.bf16.gmra.mxu0 %v291
    %v374 = vpop.f32.mrf.mxu0
    %v375 = vadd.f32 %v310, %v374
    %v376 = vpop.f32.mrf.mxu0
    %v377 = vadd.f32 %v310, %v376
    %378 = vdwg.mxu0
    %379 = vst [vmem:[#allocation10] sm:$0xff] %v370
    %380 = vst [vmem:[#allocation10 + $0x8] sm:$0xff] %v372
    %381 = vst [vmem:[#allocation10 + $0x10] sm:$0xff] %v375
    %382 = vst [vmem:[#allocation10 + $0x18] sm:$0xff] %v377
    // Predicated region
    $region46: #{tpu_custom_call.1} parent=1 // pred_check
      _
    $region47: #{tpu_custom_call.1} parent=1 // pred_check_branch
      %384 = sbr.rel (0) target = $region49
    $region48: #{tpu_custom_call.1} parent=1 // pred_region
      %386 = vsyncadd [#allocation4], 0
      %s387 = sshll.u32 [#allocation10], 4
      %s388 = int_to_ptr.vmem [resolvable:$true] %s387
      %s389 = sshll.u32 %s7, 4
      %s390 = int_to_ptr.hbm [resolvable:$true] %s389
      %395 = dma.vmem_to_hbm [thread:$0]  %s388, 512, %s390, [#allocation4], 128, 128, 8
    $region49: #{tpu_custom_call.1} parent=1 // pred_fallthru
      _
    // Predicated region
    $region50: #{tpu_custom_call.1} parent=1 // pred_check
      _
    $region51: #{tpu_custom_call.1} parent=1 // pred_check_branch
      %397 = sbr.rel (0) target = $region53
    $region52: #{tpu_custom_call.1} parent=1 // pred_region
      %399 = dma.done [#allocation4], 512
    $region53: #{tpu_custom_call.1} parent=1 // pred_fallthru
      _
    %400 = vsyncpa [#allocation3], 1
    %401 = vsyncpa [#allocation6], 1
    %402 = vsyncpa [#allocation9], 1
    %403 = vsyncpa [#allocation4], 1

// kernel: tpu_custom_call.1
$region0: #{tpu_custom_call.1}
  #allocation0 [shape = 'u32[]', space=smem, size = 0x4, offset = 0x4, fixed_abs, tag = 'smem constant byte address 0x4 - core index']
  #allocation1 [shape = 'u32[72,128]{1,0:T(1,128)}', space=vmem, size = 0x9000, scoped, tag = 'internal scratch']
  %s0 = inlined_call_operand.hbm [shape: bf16[32,128], index: 0, kind: input, shape index: {}]
  %s1 = inlined_call_operand.hbm [shape: bf16[128,128], index: 1, kind: input, shape index: {}]
  %s2 = inlined_call_operand.vmem [shape: f32[1,128], index: 2, kind: input, shape index: {}]
  %s3 = inlined_call_operand.hbm [shape: bf16[128,128], index: 3, kind: input, shape index: {}]
  %s4 = inlined_call_operand.vmem [shape: f32[1,128], index: 4, kind: input, shape index: {}]
  %s5 = inlined_call_operand.hbm [shape: bf16[128,128], index: 5, kind: input, shape index: {}]
  %s6 = inlined_call_operand.vmem [shape: f32[1,128], index: 6, kind: input, shape index: {}]
  %s7 = inlined_call_operand.hbm [shape: f32[32,128], index: 7, kind: output, shape index: {}]
  %s8 = sld [smem:[#allocation0]]
  $region54: #{tpu_custom_call.1} parent=0
    _
  %s10 = ssub.s32 1, %s8
  %s11 = scalar_select 0, %s10, %s8
  $region1: #{tpu_custom_call.1} parent=0
    #allocation2 [shape = 'u8[8192]{0}', space=vmem, size = 0x2000, scoped, tag = 'input window, operand 0, single buffered']
    #allocation3 [shape = 's32[1]{0}', space=sflag, size = 0x4, scoped, tag = 'scoped memory for tpu_custom_call.1']
    #allocation4 [shape = 's32[1]{0}', space=sflag, size = 0x4, scoped, tag = 'scoped memory for tpu_custom_call.1']
    #allocation5 [shape = 'u8[32768]{0}', space=vmem, size = 0x8000, scoped, tag = 'input window, operand 1, single buffered']
    #allocation6 [shape = 's32[1]{0}', space=sflag, size = 0x4, scoped, tag = 'scoped memory for tpu_custom_call.1']
    #allocation7 [shape = 'u8[32768]{0}', space=vmem, size = 0x8000, scoped, tag = 'input window, operand 3, single buffered']
    #allocation8 [shape = 'u8[32768]{0}', space=vmem, size = 0x8000, scoped, tag = 'input window, operand 5, single buffered']
    #allocation9 [shape = 's32[1]{0}', space=sflag, size = 0x4, scoped, tag = 'scoped memory for tpu_custom_call.1']
    #allocation10 [shape = 'u8[16384]{0}', space=vmem, size = 0x4000, scoped, tag = 'output window, operand 0, single buffered']
    %12 = vsyncpa [#allocation3], 0
    %13 = vsyncpa [#allocation6], 0
    %14 = vsyncpa [#allocation9], 0
    %15 = vsyncpa [#allocation4], 0
    // Predicated region
    $region2: #{tpu_custom_call.1} parent=1 // pred_check
      _
    $region3: #{tpu_custom_call.1} parent=1 // pred_check_branch
      %17 = sbr.rel (0) target = $region5
    $region4: #{tpu_custom_call.1} parent=1 // pred_region
      %19 = vsyncadd [#allocation3], 0
      %s20 = sshll.u32 %s0, 4
      %s21 = int_to_ptr.hbm [resolvable:$true] %s20
      %s22 = sshll.u32 [#allocation2], 4
      %s23 = int_to_ptr.vmem [resolvable:$true] %s22
      %28 = dma.hbm_to_vmem [thread:$0]  %s21, 256, %s23, [#allocation3], 64, 64, 4
    $region5: #{tpu_custom_call.1} parent=1 // pred_fallthru
      _
    // Predicated region
    $region6: #{tpu_custom_call.1} parent=1 // pred_check
      _
    $region7: #{tpu_custom_call.1} parent=1 // pred_check_branch
      %30 = sbr.rel (0) target = $region9
    $region8: #{tpu_custom_call.1} parent=1 // pred_region
      %32 = vsyncadd [#allocation6], 0
      %s33 = sshll.u32 %s1, 4
      %s34 = int_to_ptr.hbm [resolvable:$true] %s33
      %s35 = sshll.u32 [#allocation5], 4
      %s36 = int_to_ptr.vmem [resolvable:$true] %s35
      %41 = dma.hbm_to_vmem [thread:$0]  %s34, 1024, %s36, [#allocation6], 64, 64, 4
    $region9: #{tpu_custom_call.1} parent=1 // pred_fallthru
      _
    // Predicated region
    $region10: #{tpu_custom_call.1} parent=1 // pred_check
      _
    $region11: #{tpu_custom_call.1} parent=1 // pred_check_branch
      %43 = sbr.rel (0) target = $region13
    $region12: #{tpu_custom_call.1} parent=1 // pred_region
      _
    $region13: #{tpu_custom_call.1} parent=1 // pred_fallthru
      _
    // Predicated region
    $region14: #{tpu_custom_call.1} parent=1 // pred_check
      _
    $region15: #{tpu_custom_call.1} parent=1 // pred_check_branch
      %45 = sbr.rel (0) target = $region17
    $region16: #{tpu_custom_call.1} parent=1 // pred_region
      %47 = vsyncadd [#allocation6], 0
      %s48 = sshll.u32 %s3, 4
      %s49 = int_to_ptr.hbm [resolvable:$true] %s48
      %s50 = sshll.u32 [#allocation7], 4
      %s51 = int_to_ptr.vmem [resolvable:$true] %s50
      %56 = dma.hbm_to_vmem [thread:$0]  %s49, 1024, %s51, [#allocation6], 64, 64, 4
    $region17: #{tpu_custom_call.1} parent=1 // pred_fallthru
      _
    // Predicated region
    $region18: #{tpu_custom_call.1} parent=1 // pred_check
      _
    $region19: #{tpu_custom_call.1} parent=1 // pred_check_branch
      %58 = sbr.rel (0) target = $region21
    $region20: #{tpu_custom_call.1} parent=1 // pred_region
      _
    $region21: #{tpu_custom_call.1} parent=1 // pred_fallthru
      _
    // Predicated region
    $region22: #{tpu_custom_call.1} parent=1 // pred_check
      _
    $region23: #{tpu_custom_call.1} parent=1 // pred_check_branch
      %60 = sbr.rel (0) target = $region25
    $region24: #{tpu_custom_call.1} parent=1 // pred_region
      %62 = vsyncadd [#allocation9], 0
      %s63 = sshll.u32 %s5, 4
      %s64 = int_to_ptr.hbm [resolvable:$true] %s63
      %s65 = sshll.u32 [#allocation8], 4
      %s66 = int_to_ptr.vmem [resolvable:$true] %s65
      %71 = dma.hbm_to_vmem [thread:$0]  %s64, 1024, %s66, [#allocation9], 64, 64, 4
    $region25: #{tpu_custom_call.1} parent=1 // pred_fallthru
      _
    // Predicated region
    $region26: #{tpu_custom_call.1} parent=1 // pred_check
      _
    $region27: #{tpu_custom_call.1} parent=1 // pred_check_branch
      %73 = sbr.rel (0) target = $region29
    $region28: #{tpu_custom_call.1} parent=1 // pred_region
      _
    $region29: #{tpu_custom_call.1} parent=1 // pred_fallthru
      _
    // Predicated region
    $region30: #{tpu_custom_call.1} parent=1 // pred_check
      _
    $region31: #{tpu_custom_call.1} parent=1 // pred_check_branch
      %75 = sbr.rel (0) target = $region33
    $region32: #{tpu_custom_call.1} parent=1 // pred_region
      %77 = dma.done [#allocation3], 256
    $region33: #{tpu_custom_call.1} parent=1 // pred_fallthru
      _
    // Predicated region
    $region34: #{tpu_custom_call.1} parent=1 // pred_check
      _
    $region35: #{tpu_custom_call.1} parent=1 // pred_check_branch
      %79 = sbr.rel (0) target = $region37
    $region36: #{tpu_custom_call.1} parent=1 // pred_region
      %81 = dma.done [#allocation6], 1024
    $region37: #{tpu_custom_call.1} parent=1 // pred_fallthru
      _
    // Predicated region
    $region38: #{tpu_custom_call.1} parent=1 // pred_check
      _
    $region39: #{tpu_custom_call.1} parent=1 // pred_check_branch
      %83 = sbr.rel (0) target = $region41
    $region40: #{tpu_custom_call.1} parent=1 // pred_region
      %85 = dma.done [#allocation6], 1024
    $region41: #{tpu_custom_call.1} parent=1 // pred_fallthru
      _
    // Predicated region
    $region42: #{tpu_custom_call.1} parent=1 // pred_check
      _
    $region43: #{tpu_custom_call.1} parent=1 // pred_check_branch
      %87 = sbr.rel (0) target = $region45
    $region44: #{tpu_custom_call.1} parent=1 // pred_region
      %89 = dma.done [#allocation9], 1024
    $region45: #{tpu_custom_call.1} parent=1 // pred_fallthru
      _
    %v90 = vld [vmem:[#allocation2] sm:$0xf]
    %v91 = vld [vmem:[#allocation2 + $0x4] sm:$0xf]
    %v92 = vld [vmem:[#allocation2 + $0x8] sm:$0xf]
    %v93 = vld [vmem:[#allocation2 + $0xc] sm:$0xf]
    %v94 = vld [vmem:[#allocation5] sm:$0xf]
    %v95 = vld [vmem:[#allocation5 + $0x4] sm:$0xf]
    %v96 = vld [vmem:[#allocation5 + $0x8] sm:$0xf]
    %v97 = vld [vmem:[#allocation5 + $0xc] sm:$0xf]
    %v98 = vld [vmem:[#allocation5 + $0x10] sm:$0xf]
    %v99 = vld [vmem:[#allocation5 + $0x14] sm:$0xf]
    %v100 = vld [vmem:[#allocation5 + $0x18] sm:$0xf]
    %v101 = vld [vmem:[#allocation5 + $0x1c] sm:$0xf]
    %v102 = vld [vmem:[#allocation5 + $0x20] sm:$0xf]
    %v103 = vld [vmem:[#allocation5 + $0x24] sm:$0xf]
    %v104 = vld [vmem:[#allocation5 + $0x28] sm:$0xf]
    %v105 = vld [vmem:[#allocation5 + $0x2c] sm:$0xf]
    %v106 = vld [vmem:[#allocation5 + $0x30] sm:$0xf]
    %v107 = vld [vmem:[#allocation5 + $0x34] sm:$0xf]
    %v108 = vld [vmem:[#allocation5 + $0x38] sm:$0xf]
    %v109 = vld [vmem:[#allocation5 + $0x3c] sm:$0xf]
    %v110 = vld [vmem:[%s2] sm:$0x1]
    %v112 = vperm.slane %v110, 0
    %v118 = vunpack.c.l.b16 %v90
    %v119 = vunpack.c.l.b16 %v91
    %v120 = vunpack.c.l.b16 %v92
    %v121 = vunpack.c.l.b16 %v93
    %v122 = vpack.c.b16 %v119, %v118
    %v123 = vpack.c.b16 %v121, %v120
    %v142 = vunpack.c.l.b16 %v94
    %v143 = vunpack.c.l.b16 %v95
    %v144 = vunpack.c.l.b16 %v96
    %v145 = vunpack.c.l.b16 %v97
    %v146 = vunpack.c.l.b16 %v98
    %v147 = vunpack.c.l.b16 %v99
    %v148 = vunpack.c.l.b16 %v100
    %v149 = vunpack.c.l.b16 %v101
    %v150 = vunpack.c.l.b16 %v102
    %v151 = vunpack.c.l.b16 %v103
    %v152 = vunpack.c.l.b16 %v104
    %v153 = vunpack.c.l.b16 %v105
    %v154 = vunpack.c.l.b16 %v106
    %v155 = vunpack.c.l.b16 %v107
    %v156 = vunpack.c.l.b16 %v108
    %v157 = vunpack.c.l.b16 %v109
    %v158 = vpack.c.b16 %v143, %v142
    %v159 = vpack.c.b16 %v145, %v144
    %v160 = vpack.c.b16 %v147, %v146
    %v161 = vpack.c.b16 %v149, %v148
    %v162 = vpack.c.b16 %v151, %v150
    %v163 = vpack.c.b16 %v153, %v152
    %v164 = vpack.c.b16 %v155, %v154
    %v165 = vpack.c.b16 %v157, %v156
    %174 = vmatpush.bf16.msra.mxu0 %v165
    %175 = vmatpush.bf16.msra.mxu0 %v164
    %176 = vmatpush.bf16.msra.mxu0 %v163
    %177 = vmatpush.bf16.msra.mxu0 %v162
    %178 = vmatpush.bf16.msra.mxu0 %v161
    %179 = vmatpush.bf16.msra.mxu0 %v160
    %180 = vmatpush.bf16.msra.mxu0 %v159
    %181 = vmatpush.bf16.msra.mxu0 %v158
    %182 = vmatmul.bf16.gmra.mxu0 %v122
    %v183 = vpop.f32.mrf.mxu0
    %v184 = vadd.f32 %v112, %v183
    %v185 = vpop.f32.mrf.mxu0
    %v186 = vadd.f32 %v112, %v185
    %187 = vmatmul.bf16.gmra.mxu0 %v123
    %v188 = vpop.f32.mrf.mxu0
    %v189 = vadd.f32 %v112, %v188
    %v190 = vpop.f32.mrf.mxu0
    %v191 = vadd.f32 %v112, %v190
    %192 = vdwg.mxu0
    %v193 = vmax.f32 %v184, 0.0
    %v194 = vmax.f32 %v186, 0.0
    %v195 = vmax.f32 %v189, 0.0
    %v196 = vmax.f32 %v191, 0.0
    %v197 = vpack.c.bf16 %v194, %v193
    %v198 = vpack.c.bf16 %v196, %v195
    %v199 = vld [vmem:[#allocation7] sm:$0xf]
    %v200 = vld [vmem:[#allocation7 + $0x4] sm:$0xf]
    %v201 = vld [vmem:[#allocation7 + $0x8] sm:$0xf]
    %v202 = vld [vmem:[#allocation7 + $0xc] sm:$0xf]
    %v203 = vld [vmem:[#allocation7 + $0x10] sm:$0xf]
    %v204 = vld [vmem:[#allocation7 + $0x14] sm:$0xf]
    %v205 = vld [vmem:[#allocation7 + $0x18] sm:$0xf]
    %v206 = vld [vmem:[#allocation7 + $0x1c] sm:$0xf]
    %v207 = vld [vmem:[#allocation7 + $0x20] sm:$0xf]
    %v208 = vld [vmem:[#allocation7 + $0x24] sm:$0xf]
    %v209 = vld [vmem:[#allocation7 + $0x28] sm:$0xf]
    %v210 = vld [vmem:[#allocation7 + $0x2c] sm:$0xf]
    %v211 = vld [vmem:[#allocation7 + $0x30] sm:$0xf]
    %v212 = vld [vmem:[#allocation7 + $0x34] sm:$0xf]
    %v213 = vld [vmem:[#allocation7 + $0x38] sm:$0xf]
    %v214 = vld [vmem:[#allocation7 + $0x3c] sm:$0xf]
    %v215 = vld [vmem:[%s4] sm:$0x1]
    %v217 = vperm.slane %v215, 0
    %v235 = vunpack.c.l.b16 %v199
    %v236 = vunpack.c.l.b16 %v200
    %v237 = vunpack.c.l.b16 %v201
    %v238 = vunpack.c.l.b16 %v202
    %v239 = vunpack.c.l.b16 %v203
    %v240 = vunpack.c.l.b16 %v204
    %v241 = vunpack.c.l.b16 %v205
    %v242 = vunpack.c.l.b16 %v206
    %v243 = vunpack.c.l.b16 %v207
    %v244 = vunpack.c.l.b16 %v208
    %v245 = vunpack.c.l.b16 %v209
    %v246 = vunpack.c.l.b16 %v210
    %v247 = vunpack.c.l.b16 %v211
    %v248 = vunpack.c.l.b16 %v212
    %v249 = vunpack.c.l.b16 %v213
    %v250 = vunpack.c.l.b16 %v214
    %v251 = vpack.c.b16 %v236, %v235
    %v252 = vpack.c.b16 %v238, %v237
    %v253 = vpack.c.b16 %v240, %v239
    %v254 = vpack.c.b16 %v242, %v241
    %v255 = vpack.c.b16 %v244, %v243
    %v256 = vpack.c.b16 %v246, %v245
    %v257 = vpack.c.b16 %v248, %v247
    %v258 = vpack.c.b16 %v250, %v249
    %267 = vmatpush.bf16.msra.mxu0 %v258
    %268 = vmatpush.bf16.msra.mxu0 %v257
    %269 = vmatpush.bf16.msra.mxu0 %v256
    %270 = vmatpush.bf16.msra.mxu0 %v255
    %271 = vmatpush.bf16.msra.mxu0 %v254
    %272 = vmatpush.bf16.msra.mxu0 %v253
    %273 = vmatpush.bf16.msra.mxu0 %v252
    %274 = vmatpush.bf16.msra.mxu0 %v251
    %275 = vmatmul.bf16.gmra.mxu0 %v197
    %v276 = vpop.f32.mrf.mxu0
    %v277 = vadd.f32 %v217, %v276
    %v278 = vpop.f32.mrf.mxu0
    %v279 = vadd.f32 %v217, %v278
    %280 = vmatmul.bf16.gmra.mxu0 %v198
    %v281 = vpop.f32.mrf.mxu0
    %v282 = vadd.f32 %v217, %v281
    %v283 = vpop.f32.mrf.mxu0
    %v284 = vadd.f32 %v217, %v283
    %285 = vdwg.mxu0
    %v286 = vmax.f32 %v277, 0.0
    %v287 = vmax.f32 %v279, 0.0
    %v288 = vmax.f32 %v282, 0.0
    %v289 = vmax.f32 %v284, 0.0
    %v290 = vpack.c.bf16 %v287, %v286
    %v291 = vpack.c.bf16 %v289, %v288
    %v292 = vld [vmem:[#allocation8] sm:$0xf]
    %v293 = vld [vmem:[#allocation8 + $0x4] sm:$0xf]
    %v294 = vld [vmem:[#allocation8 + $0x8] sm:$0xf]
    %v295 = vld [vmem:[#allocation8 + $0xc] sm:$0xf]
    %v296 = vld [vmem:[#allocation8 + $0x10] sm:$0xf]
    %v297 = vld [vmem:[#allocation8 + $0x14] sm:$0xf]
    %v298 = vld [vmem:[#allocation8 + $0x18] sm:$0xf]
    %v299 = vld [vmem:[#allocation8 + $0x1c] sm:$0xf]
    %v300 = vld [vmem:[#allocation8 + $0x20] sm:$0xf]
    %v301 = vld [vmem:[#allocation8 + $0x24] sm:$0xf]
    %v302 = vld [vmem:[#allocation8 + $0x28] sm:$0xf]
    %v303 = vld [vmem:[#allocation8 + $0x2c] sm:$0xf]
    %v304 = vld [vmem:[#allocation8 + $0x30] sm:$0xf]
    %v305 = vld [vmem:[#allocation8 + $0x34] sm:$0xf]
    %v306 = vld [vmem:[#allocation8 + $0x38] sm:$0xf]
    %v307 = vld [vmem:[#allocation8 + $0x3c] sm:$0xf]
    %v308 = vld [vmem:[%s6] sm:$0x1]
    %v310 = vperm.slane %v308, 0
    %v328 = vunpack.c.l.b16 %v292
    %v329 = vunpack.c.l.b16 %v293
    %v330 = vunpack.c.l.b16 %v294
    %v331 = vunpack.c.l.b16 %v295
    %v332 = vunpack.c.l.b16 %v296
    %v333 = vunpack.c.l.b16 %v297
    %v334 = vunpack.c.l.b16 %v298
    %v335 = vunpack.c.l.b16 %v299
    %v336 = vunpack.c.l.b16 %v300
    %v337 = vunpack.c.l.b16 %v301
    %v338 = vunpack.c.l.b16 %v302
    %v339 = vunpack.c.l.b16 %v303
    %v340 = vunpack.c.l.b16 %v304
    %v341 = vunpack.c.l.b16 %v305
    %v342 = vunpack.c.l.b16 %v306
    %v343 = vunpack.c.l.b16 %v307
    %v344 = vpack.c.b16 %v329, %v328
    %v345 = vpack.c.b16 %v331, %v330
    %v346 = vpack.c.b16 %v333, %v332
    %v347 = vpack.c.b16 %v335, %v334
    %v348 = vpack.c.b16 %v337, %v336
    %v349 = vpack.c.b16 %v339, %v338
    %v350 = vpack.c.b16 %v341, %v340
    %v351 = vpack.c.b16 %v343, %v342
    %360 = vmatpush.bf16.msra.mxu0 %v351
    %361 = vmatpush.bf16.msra.mxu0 %v350
    %362 = vmatpush.bf16.msra.mxu0 %v349
    %363 = vmatpush.bf16.msra.mxu0 %v348
    %364 = vmatpush.bf16.msra.mxu0 %v347
    %365 = vmatpush.bf16.msra.mxu0 %v346
    %366 = vmatpush.bf16.msra.mxu0 %v345
    %367 = vmatpush.bf16.msra.mxu0 %v344
    %368 = vmatmul.bf16.gmra.mxu0 %v290
    %v369 = vpop.f32.mrf.mxu0
    %v370 = vadd.f32 %v310, %v369
    %v371 = vpop.f32.mrf.mxu0
    %v372 = vadd.f32 %v310, %v371
    %373 = vmatmul.bf16.gmra.mxu0 %v291
    %v374 = vpop.f32.mrf.mxu0
    %v375 = vadd.f32 %v310, %v374
    %v376 = vpop.f32.mrf.mxu0
    %v377 = vadd.f32 %v310, %v376
    %378 = vdwg.mxu0
    %379 = vst [vmem:[#allocation10] sm:$0xff] %v370
    %380 = vst [vmem:[#allocation10 + $0x8] sm:$0xff] %v372
    %381 = vst [vmem:[#allocation10 + $0x10] sm:$0xff] %v375
    %382 = vst [vmem:[#allocation10 + $0x18] sm:$0xff] %v377
    // Predicated region
    $region46: #{tpu_custom_call.1} parent=1 // pred_check
      _
    $region47: #{tpu_custom_call.1} parent=1 // pred_check_branch
      %384 = sbr.rel (0) target = $region49
    $region48: #{tpu_custom_call.1} parent=1 // pred_region
      %386 = vsyncadd [#allocation4], 0
      %s387 = sshll.u32 [#allocation10], 4
      %s388 = int_to_ptr.vmem [resolvable:$true] %s387
      %s389 = sshll.u32 %s7, 4
      %s390 = int_to_ptr.hbm [resolvable:$true] %s389
      %395 = dma.vmem_to_hbm [thread:$0]  %s388, 512, %s390, [#allocation4], 128, 128, 8
    $region49: #{tpu_custom_call.1} parent=1 // pred_fallthru
      _
    // Predicated region
    $region50: #{tpu_custom_call.1} parent=1 // pred_check
      _
    $region51: #{tpu_custom_call.1} parent=1 // pred_check_branch
      %397 = sbr.rel (0) target = $region53
    $region52: #{tpu_custom_call.1} parent=1 // pred_region
      %399 = dma.done [#allocation4], 512
    $region53: #{tpu_custom_call.1} parent=1 // pred_fallthru
      _
    %400 = vsyncpa [#allocation3], 1
    %401 = vsyncpa [#allocation6], 1
    %402 = vsyncpa [#allocation9], 1
    %403 = vsyncpa [#allocation4], 1

</llo_original>
